<compile_context>
chip_gen: v7x
topology: tpu7x:2x2x1
jax: 0.10.0
libtpu: 0.0.40
codegen_flags: <defaults>
</compile_context>

<pallas_src>
import jax
import jax.numpy as jnp
import numpy as np
from jax import lax
from jax.experimental import pallas as pl
from jax.experimental.pallas import tpu as pltpu

f32 = jnp.float32


def _round_up(x, m):
    return (x + m - 1) // m * m


def _divisor_tile(n, target, step):
    """Largest multiple of `step` that divides `n` and is <= max(target, step)."""
    best = step
    d = step
    lim = min(n, max(target, step))
    while d <= lim:
        if n % d == 0:
            best = d
        d += step
    return best


def _chunk_size(T, target=8):
    for c in range(min(T, target), 0, -1):
        if T % c == 0:
            return c
    return 1


# ---------------------------------------------------------------------------
# Kernel 1: tiled y = x @ w + b  (input projection / table projection)
# ---------------------------------------------------------------------------
def _linear_bias_kernel(x_ref, w_ref, b_ref, o_ref):
    o_ref[...] = (jnp.dot(x_ref[...], w_ref[...], preferred_element_type=f32)
                  + b_ref[...]).astype(o_ref.dtype)


def _linear_bias(x, w, b, *, out_dtype=f32, tm=256, tn=512):
    M, K = x.shape
    _, N = w.shape
    Mp = _round_up(M, 8)
    Np = _round_up(N, 128)
    if Mp != M:
        x = jnp.pad(x, ((0, Mp - M), (0, 0)))
    if Np != N:
        w = jnp.pad(w, ((0, 0), (0, Np - N)))
        b = jnp.pad(b, ((0, 0), (0, Np - N)))
    bm = _divisor_tile(Mp, tm, 8)        # divides Mp -> no wasted padded-row MXU work
    bn = _divisor_tile(Np, tn, 128)      # lane-dense output stores

    out = pl.pallas_call(
        _linear_bias_kernel,
        out_shape=jax.ShapeDtypeStruct((Mp, Np), out_dtype),
        grid=(Mp // bm, Np // bn),
        in_specs=[pl.BlockSpec((bm, K), lambda i, j: (i, 0)),
                  pl.BlockSpec((K, bn), lambda i, j: (0, j)),
                  pl.BlockSpec((1, bn), lambda i, j: (0, j))],
        out_specs=pl.BlockSpec((bm, bn), lambda i, j: (i, j)),
        compiler_params=pltpu.CompilerParams(
            dimension_semantics=("parallel", "parallel")),
    )(x, w, b.astype(f32))
    if Mp != M or Np != N:
        out = out[:M, :N]
    return out


# ---------------------------------------------------------------------------
# Kernel 2: output head  logits = out_f @ wf + out_r @ wr + b   (no concat)
# ---------------------------------------------------------------------------
def _head_kernel(xf_ref, xr_ref, wf_ref, wr_ref, b_ref, o_ref):
    acc = jnp.dot(xf_ref[...], wf_ref[...], preferred_element_type=f32)
    acc = acc + jnp.dot(xr_ref[...], wr_ref[...], preferred_element_type=f32)
    o_ref[...] = (acc + b_ref[...]).astype(o_ref.dtype)


def _head(xf, xr, wf, wr, b, *, tm=256, tn=512):
    M, Hp = xf.shape
    _, N = wf.shape                      # already 128-padded by caller
    bm = _divisor_tile(M, tm, 8)
    bn = _divisor_tile(N, tn, 128)
    return pl.pallas_call(
        _head_kernel,
        out_shape=jax.ShapeDtypeStruct((M, N), f32),
        grid=(M // bm, N // bn),
        in_specs=[pl.BlockSpec((bm, Hp), lambda i, j: (i, 0)),
                  pl.BlockSpec((bm, Hp), lambda i, j: (i, 0)),
                  pl.BlockSpec((Hp, bn), lambda i, j: (0, j)),
                  pl.BlockSpec((Hp, bn), lambda i, j: (0, j)),
                  pl.BlockSpec((1, bn), lambda i, j: (0, j))],
        out_specs=pl.BlockSpec((bm, bn), lambda i, j: (i, j)),
        compiler_params=pltpu.CompilerParams(
            dimension_semantics=("parallel", "parallel")),
    )(xf, xr, wf, wr, b)


# ---------------------------------------------------------------------------
# Kernel 3: time-chunked bidirectional LSTM recurrence, fwd/rev interleaved.
#   grid=(nT,), "arbitrary" (serial carry in scratch).  Per chunk:
#     read h/c from scratch -> vregs, unroll Tc static steps (one forward cell +
#     one reverse cell each), write hidden outputs, write scratch back.
# ---------------------------------------------------------------------------
def _bilstm_chunk_kernel(xpf_ref, xpr_ref, whh_ref, h0_ref, c0_ref,
                         outf_ref, outr_ref, hN_ref, cN_ref, state_s):
    k = pl.program_id(0)
    Tc = outf_ref.shape[0]
    Hp = outf_ref.shape[-1]

    @pl.when(k == 0)
    def _():
        state_s[0] = h0_ref[0]
        state_s[1] = c0_ref[0]
        state_s[2] = h0_ref[1]
        state_s[3] = c0_ref[1]

    # state carried in vregs inside the chunk (scratch only at chunk boundaries)
    h_f = state_s[0]
    c_f = state_s[1]
    h_r = state_s[2]
    c_r = state_s[3]

    whh_f = whh_ref[0]                   # hoisted: loaded once per chunk
    whh_r = whh_ref[1]

    def cell(x_gates, h, c, whh):
        gates = x_gates.astype(f32) + jnp.dot(h.astype(whh.dtype), whh,
                                              preferred_element_type=f32)
        # gate layout [i, f, o, g]: ONE sigmoid over a contiguous 3*Hp slab
        sig = jax.nn.sigmoid(gates[:, :3 * Hp])
        i_g = sig[:, 0 * Hp:1 * Hp]
        f_g = sig[:, 1 * Hp:2 * Hp]
        o_g = sig[:, 2 * Hp:3 * Hp]
        g_g = jnp.tanh(gates[:, 3 * Hp:])
        c_new = f_g * c + i_g * g_g
        h_new = o_g * jnp.tanh(c_new)
        return h_new, c_new

    # Static, fully-unrolled chunk loop: one forward + one reverse cell per step.
    # The two chains are independent -> the scheduler fills MXU/EUP latency bubbles.
    for s in range(Tc):
        tr = Tc - 1 - s
        h_f, c_f = cell(xpf_ref[s], h_f, c_f, whh_f)
        h_r, c_r = cell(xpr_ref[tr], h_r, c_r, whh_r)
        outf_ref[s] = h_f.astype(outf_ref.dtype)
        outr_ref[tr] = h_r.astype(outr_ref.dtype)

    state_s[0] = h_f
    state_s[1] = c_f
    state_s[2] = h_r
    state_s[3] = c_r

    @pl.when(k == pl.num_programs(0) - 1)
    def _():
        hN_ref[0] = h_f
        hN_ref[1] = h_r
        cN_ref[0] = c_f
        cN_ref[1] = c_r


# ---------------------------------------------------------------------------
# Wrapper
# ---------------------------------------------------------------------------
def lstm_representation_forward(params, input_seq, hidden_in, mem_in, *,
                                mm_dtype=jnp.bfloat16, time_chunk=8,
                                input_proj="auto"):
    emb_table = params['embedding']
    V, E = emb_table.shape
    B, T = input_seq.shape
    H = hidden_in.shape[-1]

    Hp = _round_up(H, 128)               # lane-aligned hidden
    Bp = _round_up(B, 8)                 # sublane-aligned batch
    Tc = _chunk_size(T, time_chunk)      # static time-chunk (divides T)
    nT = T // Tc

    # --- pad + gate-reorder weights: PyTorch [i,f,g,o] -> [i,f,o,g] (sigmoids contiguous)
    perm = (0, 1, 3, 2)

    def pad_ih(w):                       # (E, 4H) -> (E, 4Hp)
        w4 = w.reshape(E, 4, H)[:, perm, :]
        return jnp.pad(w4, ((0, 0), (0, 0), (0, Hp - H))).reshape(E, 4 * Hp)

    def pad_hh(w):                       # (H, 4H) -> (Hp, 4Hp)
        w4 = w.reshape(H, 4, H)[:, perm, :]
        return jnp.pad(w4, ((0, Hp - H), (0, 0), (0, Hp - H))).reshape(Hp, 4 * Hp)

    def pad_bias(b):                     # (1, 4H) -> (1, 4Hp)
        b4 = b.reshape(1, 4, H)[:, perm, :]
        return jnp.pad(b4, ((0, 0), (0, 0), (0, Hp - H))).reshape(1, 4 * Hp)

    w_ih = jnp.concatenate([pad_ih(params['w_ih_f']),
                            pad_ih(params['w_ih_r'])], axis=1).astype(mm_dtype)
    bias = jnp.concatenate([pad_bias(params['b_f']),
                            pad_bias(params['b_r'])], axis=1).astype(f32)
    w_hh = jnp.stack([pad_hh(params['w_hh_f']),
                      pad_hh(params['w_hh_r'])], axis=0).astype(mm_dtype)

    def pad_state(s):                    # (2, B, H) -> (2, Bp, Hp)
        return jnp.pad(s.astype(f32), ((0, 0), (0, Bp - B), (0, Hp - H)))

    h0 = pad_state(hidden_in)
    c0 = pad_state(mem_in)

    # --- 1) input projection x @ [W_ih_f|W_ih_r] + [b_f|b_r], hoisted out of the recurrence
    if input_proj == "table" or (input_proj == "auto" and V <= T * Bp):
        # small vocab: project the embedding table once, then row-gather (kills the big matmul)
        table_proj = _linear_bias(emb_table.astype(mm_dtype), w_ih, bias,
                                  out_dtype=mm_dtype)                 # (V, 8Hp)
        xp = jnp.take(table_proj, input_seq.T, axis=0)                # (T, B, 8Hp)
        xp = jnp.pad(xp, ((0, 0), (0, Bp - B), (0, 0)))
    else:
        emb_tm = jnp.take(emb_table, input_seq.T, axis=0).astype(mm_dtype)  # (T, B, E)
        emb_tm = jnp.pad(emb_tm, ((0, 0), (0, Bp - B), (0, 0)))
        xp = _linear_bias(emb_tm.reshape(T * Bp, E), w_ih, bias,
                          out_dtype=mm_dtype).reshape(T, Bp, 8 * Hp)

    # --- 2) time-chunked bidirectional recurrence (forward & reverse interleaved)
    out_f, out_r, hN, cN = pl.pallas_call(
        _bilstm_chunk_kernel,
        out_shape=(jax.ShapeDtypeStruct((T, Bp, Hp), mm_dtype),
                   jax.ShapeDtypeStruct((T, Bp, Hp), mm_dtype),
                   jax.ShapeDtypeStruct((2, Bp, Hp), f32),
                   jax.ShapeDtypeStruct((2, Bp, Hp), f32)),
        grid=(nT,),
        in_specs=[
            # forward half of xp, time-chunk k
            pl.BlockSpec((Tc, Bp, 4 * Hp), lambda k: (k, 0, 0)),
            # reverse half of xp, time-chunk nT-1-k (chunk-level reversal; in-chunk
            # reversal is a static reversed loop inside the kernel)
            pl.BlockSpec((Tc, Bp, 4 * Hp), lambda k: (nT - 1 - k, 0, 1)),
            pl.BlockSpec((2, Hp, 4 * Hp), lambda k: (0, 0, 0)),
            pl.BlockSpec((2, Bp, Hp), lambda k: (0, 0, 0)),
            pl.BlockSpec((2, Bp, Hp), lambda k: (0, 0, 0)),
        ],
        out_specs=(pl.BlockSpec((Tc, Bp, Hp), lambda k: (k, 0, 0)),
                   pl.BlockSpec((Tc, Bp, Hp), lambda k: (nT - 1 - k, 0, 0)),
                   pl.BlockSpec((2, Bp, Hp), lambda k: (0, 0, 0)),
                   pl.BlockSpec((2, Bp, Hp), lambda k: (0, 0, 0))),
        scratch_shapes=[pltpu.VMEM((4, Bp, Hp), f32)],
        compiler_params=pltpu.CompilerParams(
            dimension_semantics=("arbitrary",)),
    )(xp, xp, w_hh, h0, c0)
    # TODO(synk): on v7x (2 TensorCores) the two directions could instead be split across
    # cores via grid=(2, nT) with a "parallel" direction axis; here they are interleaved in
    # one body, which is what fills the latency bubbles on single-TC v5e/v6e.

    # --- 3) output head: logits = out_f @ W_out[:H] + out_r @ W_out[H:] + b (no concat)
    Vp = _round_up(V, 128)
    wf = jnp.zeros((Hp, Vp), f32).at[:H, :V].set(params['w_out'][:H]).astype(mm_dtype)
    wr = jnp.zeros((Hp, Vp), f32).at[:H, :V].set(params['w_out'][H:]).astype(mm_dtype)
    b_out = jnp.pad(params['b_out'].astype(f32), ((0, 0), (0, Vp - V)))

    logits_tm = _head(out_f.reshape(T * Bp, Hp), out_r.reshape(T * Bp, Hp),
                      wf, wr, b_out)                                  # (T*Bp, Vp) f32
    logits_tm = logits_tm.reshape(T, Bp, Vp)[:, :B, :V]
    logits = jnp.transpose(logits_tm, (1, 0, 2))                      # (B, T, V) batch_first

    return logits, hN[:, :B, :H], cN[:, :B, :H]


# ---------------------------------------------------------------------------
# Pure-JAX reference (for correctness check)
# ---------------------------------------------------------------------------
def _ref_forward(params, input_seq, hidden_in, mem_in):
    emb = jnp.take(params['embedding'], input_seq, axis=0)            # (B, T, E)
    x_tm = jnp.transpose(emb, (1, 0, 2)).astype(f32)                  # (T, B, E)

    def cell(x_t, h, c, wih, whh, b):
        gates = x_t @ wih + h @ whh + b
        i, f, g, o = jnp.split(gates, 4, axis=-1)
        c = jax.nn.sigmoid(f) * c + jax.nn.sigmoid(i) * jnp.tanh(g)
        h = jax.nn.sigmoid(o) * jnp.tanh(c)
        return h, c

    def scan_f(carry, x_t):
        h, c = cell(x_t, carry[0], carry[1],
                    params['w_ih_f'], params['w_hh_f'], params['b_f'])
        return (h, c), h

    def scan_r(carry, x_t):
        h, c = cell(x_t, carry[0], carry[1],
                    params['w_ih_r'], params['w_hh_r'], params['b_r'])
        return (h, c), h

    (hf, cf), out_f = lax.scan(scan_f, (hidden_in[0], mem_in[0]), x_tm)
    (hr, cr), out_r_rev = lax.scan(scan_r, (hidden_in[1], mem_in[1]), x_tm[::-1])
    out_r = out_r_rev[::-1]
    out = jnp.transpose(jnp.concatenate([out_f, out_r], axis=-1), (1, 0, 2))
    logits = out @ params['w_out'] + params['b_out']
    return logits, jnp.stack([hf, hr]), jnp.stack([cf, cr])


# ---------------------------------------------------------------------------
if __name__ == "__main__":
    V = 16      # num_emb
    E = 32      # emb_size
    H = 32      # hidden_size
    B = 2       # batch
    T = 8       # seq len
    D = 2       # bidirectional, num_layers = 1

    key = jax.random.PRNGKey(0)
    ks = jax.random.split(key, 12)
    bound = float(1.0 / np.sqrt(H))

    def u(k, shape):
        return jax.random.uniform(k, shape, f32, -bound, bound)

    params = {
        'embedding': jax.random.normal(ks[0], (V, E), f32) * 0.1,
        # forward direction (stored transposed: x @ W), bias = b_ih + b_hh folded
        'w_ih_f': u(ks[1], (E, 4 * H)),
        'w_hh_f': u(ks[2], (H, 4 * H)),
        'b_f':    u(ks[3], (1, 4 * H)),
        # reverse direction
        'w_ih_r': u(ks[4], (E, 4 * H)),
        'w_hh_r': u(ks[5], (H, 4 * H)),
        'b_r':    u(ks[6], (1, 4 * H)),
        # mlp_out: Linear(2H -> V)
        'w_out':  u(ks[7], (2 * H, V)),
        'b_out':  u(ks[8], (1, V)),
    }

    input_seq = jax.random.randint(ks[9], (B, T), 0, V, dtype=jnp.int32)
    hidden_in = jax.random.normal(ks[10], (D, B, H), f32) * 0.1
    mem_in = jax.random.normal(ks[11], (D, B, H), f32) * 0.1

    ref_logits, ref_h, ref_c = _ref_forward(params, input_seq, hidden_in, mem_in)

    def check(outs, tol):
        logits, h_out, c_out = outs
        assert logits.shape == (B, T, V)
        assert h_out.shape == (D, B, H) and c_out.shape == (D, B, H)
        np.testing.assert_allclose(np.asarray(logits), np.asarray(ref_logits),
                                   rtol=tol, atol=tol)
        np.testing.assert_allclose(np.asarray(h_out), np.asarray(ref_h),
                                   rtol=tol, atol=tol)
        np.testing.assert_allclose(np.asarray(c_out), np.asarray(ref_c),
                                   rtol=tol, atol=tol)

    # f32 matmuls, small-vocab table-projection path
    check(jax.block_until_ready(lstm_representation_forward(
        params, input_seq, hidden_in, mem_in,
        mm_dtype=jnp.float32, input_proj="table")), 1e-4)

    # f32 matmuls, full (T*Bp, E) x (E, 8Hp) projection path
    check(jax.block_until_ready(lstm_representation_forward(
        params, input_seq, hidden_in, mem_in,
        mm_dtype=jnp.float32, input_proj="matmul")), 1e-4)

    # bf16 matmul operands (MXU-native on v6e/v7x); gate/elementwise math stays f32
    check(jax.block_until_ready(lstm_representation_forward(
        params, input_seq, hidden_in, mem_in,
        mm_dtype=jnp.bfloat16, input_proj="auto")), 3e-2)

    print("KERNEL_OK")
</pallas_src>

<mosaic_0001>
module attributes {stable_mosaic.version = 11 : i64} {
  func.func @_linear_bias_kernel(%arg0: i32, %arg1: i32, %arg2: memref<16x32xf32, #tpu.memory_space<vmem>>, %arg3: memref<32x512xf32, #tpu.memory_space<vmem>>, %arg4: memref<1x512xf32, #tpu.memory_space<vmem>>, %arg5: memref<16x512xf32, #tpu.memory_space<vmem>>) attributes {dimension_semantics = [#tpu.dimension_semantics<parallel>, #tpu.dimension_semantics<parallel>], iteration_bounds = array<i64: 1, 2>, scalar_prefetch = 0 : i64, scratch_operands = 0 : i64, tpu.core_type = #tpu.core_type<tc>, window_params = [{transform_indices = @transform_0, window_bounds = array<i64: 16, 32>}, {transform_indices = @transform_1, window_bounds = array<i64: 32, 512>}, {transform_indices = @transform_2, window_bounds = array<i64: 1, 512>}, {transform_indices = @transform_3, window_bounds = array<i64: 16, 512>}]} {
    %c0 = arith.constant 0 : index
    %c0_0 = arith.constant 0 : index
    %0 = vector.load %arg2[%c0, %c0_0] : memref<16x32xf32, #tpu.memory_space<vmem>>, vector<16x32xf32>
    %c0_1 = arith.constant 0 : index
    %c0_2 = arith.constant 0 : index
    %1 = vector.load %arg3[%c0_1, %c0_2] : memref<32x512xf32, #tpu.memory_space<vmem>>, vector<32x512xf32>
    %cst = arith.constant dense<0.000000e+00> : vector<16x512xf32>
    %2 = tpu.matmul %0, %1, %cst {dimension_numbers = #tpu.dot_dimension_numbers<[1], [0], [0], [1], [0, 0, 1, 1], [], []>} : vector<16x32xf32>, vector<32x512xf32>, vector<16x512xf32> -> vector<16x512xf32>
    %c0_3 = arith.constant 0 : index
    %c0_4 = arith.constant 0 : index
    %3 = vector.load %arg4[%c0_3, %c0_4] : memref<1x512xf32, #tpu.memory_space<vmem>>, vector<1x512xf32>
    %4 = vector.broadcast %3 : vector<1x512xf32> to vector<16x512xf32>
    %5 = arith.addf %2, %4 : vector<16x512xf32>
    %c0_5 = arith.constant 0 : index
    %c0_6 = arith.constant 0 : index
    %6 = vector.load %arg5[%c0_5, %c0_6] : memref<16x512xf32, #tpu.memory_space<vmem>>, vector<16x512xf32>
    tpu.vector_store %arg5[%c0_5, %c0_6], %5 {strides = array<i32>} : memref<16x512xf32, #tpu.memory_space<vmem>>, vector<16x512xf32>,
    return
  }
  func.func @transform_0(%arg0: i32, %arg1: i32) -> (i32, i32) {
    %c0_i32 = arith.constant 0 : i32
    %c0_i32_0 = arith.constant 0 : i32
    return %arg0, %c0_i32 : i32, i32
  }
  func.func @transform_1(%arg0: i32, %arg1: i32) -> (i32, i32) {
    %c0_i32 = arith.constant 0 : i32
    %c0_i32_0 = arith.constant 0 : i32
    return %c0_i32, %arg1 : i32, i32
  }
  func.func @transform_2(%arg0: i32, %arg1: i32) -> (i32, i32) {
    %c0_i32 = arith.constant 0 : i32
    %c0_i32_0 = arith.constant 0 : i32
    return %c0_i32, %arg1 : i32, i32
  }
  func.func @transform_3(%arg0: i32, %arg1: i32) -> (i32, i32) {
    %c0_i32 = arith.constant 0 : i32
    return %arg0, %arg1 : i32, i32
  }
}

</mosaic_0001>

<llo_original>
// kernel: tpu_custom_call.1
$region0: #{tpu_custom_call.1}
  #allocation0 [shape = 'u32[]', space=smem, size = 0x4, offset = 0x4, fixed_abs, tag = 'smem constant byte address 0x4 - core index']
  #allocation1 [shape = 'u32[144,128]{1,0:T(1,128)}', space=vmem, size = 0x12000, scoped, tag = 'internal scratch']
  %s0 = inlined_call_operand.hbm [shape: f32[16,32], index: 0, kind: input, shape index: {}]
  %s1 = inlined_call_operand.hbm [shape: f32[32,1024], index: 1, kind: input, shape index: {}]
  %s2 = inlined_call_operand.hbm [shape: f32[1,1024], index: 2, kind: input, shape index: {}]
  %s3 = inlined_call_operand.hbm [shape: f32[16,1024], index: 3, kind: output, shape index: {}]
  %s4 = sld [smem:[#allocation0]]
  $region57: #{tpu_custom_call.1} parent=0
    _
  %s6 = ssub.s32 1, %s4
  %s7 = scalar_select 0, %s6, %s4
  $region1: #{tpu_custom_call.1} parent=0
    #allocation2 [shape = 'u8[8192]{0}', space=vmem, size = 0x2000, scoped, tag = 'input window, operand 0, single buffered']
    #allocation3 [shape = 's32[2]{0}', space=sflag, size = 0x8, scoped, tag = 'scoped memory for tpu_custom_call.1']
    #allocation4 [shape = 's32[2]{0}', space=sflag, size = 0x8, scoped, tag = 'scoped memory for tpu_custom_call.1']
    #allocation5 [shape = 'u8[131072]{0}', space=vmem, size = 0x20000, scoped, tag = 'input window, operand 1']
    #allocation6 [shape = 's32[2]{0}', space=sflag, size = 0x8, scoped, tag = 'scoped memory for tpu_custom_call.1']
    #allocation7 [shape = 'u8[4096]{0}', space=vmem, size = 0x1000, scoped, tag = 'input window, operand 2']
    #allocation8 [shape = 'u8[65536]{0}', space=vmem, size = 0x10000, scoped, tag = 'output window, operand 0']
    %8 = vsyncpa [#allocation3], 0
    %9 = vsyncpa [#allocation6], 0
    %s10 = scalar_lea.sflag [#allocation6], 1
    %11 = vsyncpa %s10, 0
    %12 = vsyncpa [#allocation4], 0
    %s13 = scalar_lea.sflag [#allocation4], 1
    %14 = vsyncpa %s13, 0
    loop: start=0, step=1, limit=4
    $region2: #{tpu_custom_call.1} parent=1 // loop_pre_header
      _
    $region3: #{tpu_custom_call.1} parent=1 // loop_header
      %s16 = sphi 0, %s20
      %p17 = scmp.ge.s32.totalorder %s16, 4
      %s23 = sphi 0, %s35
      %s24 = sphi 0, %s31
      %s25 = sphi 0, %s23
      %s26 = sphi 0, %s24
      %s27 = sphi 0, %s25
      %s28 = sphi 0, %s26
      %s38 = sphi 0, %s40
      %s41 = sphi 0, %s38
      %s42 = sphi 0, %s41
      %s58 = sphi 0, %s42
      %s64 = sphi 0, %s66
      %s67 = sphi 0, %s64
      %s68 = sphi 0, %s67
      %s84 = sphi 0, %s68
      %s90 = sphi 0, %s92
      %s93 = sphi 0, %s90
      %s94 = sphi 0, %s93
      %s110 = sphi 0, %s94
      %s118 = sphi 0, %s120
      %s121 = sphi 0, %s118
      %s122 = sphi 0, %s121
      %s138 = sphi 0, %s122
    $region4: #{tpu_custom_call.1} parent=1 // loop_header_branch
      %19 = sbr.rel (%p17) target = $region8
    $region5: #{tpu_custom_call.1} parent=1 // loop_body
      %s21 = ssub.s32 %s16, 1
      %s22 = ssub.s32 %s16, 2
      %s29 = sadd.s32 1, %s24
      %p30 = scmp.ge.s32.totalorder %s29, 2
      %s31 = scalar_select %p30, 0, %s29
      %s32 = sadd.s32 1, %s23
      %s33 = scalar_select %p30, %s32, %s23
      %p34 = scmp.ge.s32.totalorder %s33, 1
      %s35 = scalar_select %p34, 0, %s33
      %s36 = ssub.s32 %s23, %s35
      %p37 = scmp.eq.s32.totalorder %s36, 0
      %s39 = sadd.s32 %s38, 1
      %s40 = scalar_select %p37, %s38, %s39
      %p43 = pneg %p37
      %p44 = scmp.eq.s32.totalorder %s16, 1
      %p45 = por %p43, %p44
      %p46 = scmp.ne.s32.totalorder %s38, %s41
      %p47 = scmp.eq.s32.totalorder %s16, 0
      %p48 = por %p46, %p47
      %p49 = scmp.ne.s32.totalorder %s38, %s41
      %p50 = scmp.eq.s32.totalorder %s21, 1
      %p51 = por %p49, %p50
      %p52 = scmp.ne.s32.totalorder %s41, %s42
      %p53 = scmp.eq.s32.totalorder %s21, 0
      %p54 = por %p52, %p53
      %p55 = scmp.ne.s32.totalorder %s41, %s42
      %p56 = scmp.eq.s32.totalorder %s22, 1
      %p57 = por %p55, %p56
      %p59 = scmp.ne.s32.totalorder %s42, %s58
      %p60 = scmp.eq.s32.totalorder %s22, 0
      %p61 = por %p59, %p60
      %s62 = ssub.s32 %s24, %s31
      %p63 = scmp.eq.s32.totalorder %s62, 0
      %s65 = sadd.s32 %s64, 1
      %s66 = scalar_select %p63, %s64, %s65
      %p69 = pneg %p63
      %p70 = scmp.eq.s32.totalorder %s16, 1
      %p71 = por %p69, %p70
      %p72 = scmp.ne.s32.totalorder %s64, %s67
      %p73 = scmp.eq.s32.totalorder %s16, 0
      %p74 = por %p72, %p73
      %p75 = scmp.ne.s32.totalorder %s64, %s67
      %p76 = scmp.eq.s32.totalorder %s21, 1
      %p77 = por %p75, %p76
      %p78 = scmp.ne.s32.totalorder %s67, %s68
      %p79 = scmp.eq.s32.totalorder %s21, 0
      %p80 = por %p78, %p79
      %p81 = scmp.ne.s32.totalorder %s67, %s68
      %p82 = scmp.eq.s32.totalorder %s22, 1
      %p83 = por %p81, %p82
      %p85 = scmp.ne.s32.totalorder %s68, %s84
      %p86 = scmp.eq.s32.totalorder %s22, 0
      %p87 = por %p85, %p86
      %s88 = ssub.s32 %s24, %s31
      %p89 = scmp.eq.s32.totalorder %s88, 0
      %s91 = sadd.s32 %s90, 1
      %s92 = scalar_select %p89, %s90, %s91
      %p95 = pneg %p89
      %p96 = scmp.eq.s32.totalorder %s16, 1
      %p97 = por %p95, %p96
      %p98 = scmp.ne.s32.totalorder %s90, %s93
      %p99 = scmp.eq.s32.totalorder %s16, 0
      %p100 = por %p98, %p99
      %p101 = scmp.ne.s32.totalorder %s90, %s93
      %p102 = scmp.eq.s32.totalorder %s21, 1
      %p103 = por %p101, %p102
      %p104 = scmp.ne.s32.totalorder %s93, %s94
      %p105 = scmp.eq.s32.totalorder %s21, 0
      %p106 = por %p104, %p105
      %p107 = scmp.ne.s32.totalorder %s93, %s94
      %p108 = scmp.eq.s32.totalorder %s22, 1
      %p109 = por %p107, %p108
      %p111 = scmp.ne.s32.totalorder %s94, %s110
      %p112 = scmp.eq.s32.totalorder %s22, 0
      %p113 = por %p111, %p112
      %s114 = ssub.s32 %s23, %s35
      %s115 = ssub.s32 %s24, %s31
      %s116 = sor.u32 %s114, %s115
      %p117 = scmp.eq.s32.totalorder %s116, 0
      %s119 = sadd.s32 %s118, 1
      %s120 = scalar_select %p117, %s118, %s119
      %p123 = pneg %p117
      %p124 = scmp.eq.s32.totalorder %s16, 1
      %p125 = por %p123, %p124
      %p126 = scmp.ne.s32.totalorder %s118, %s121
      %p127 = scmp.eq.s32.totalorder %s16, 0
      %p128 = por %p126, %p127
      %p129 = scmp.ne.s32.totalorder %s118, %s121
      %p130 = scmp.eq.s32.totalorder %s21, 1
      %p131 = por %p129, %p130
      %p132 = scmp.ne.s32.totalorder %s121, %s122
      %p133 = scmp.eq.s32.totalorder %s21, 0
      %p134 = por %p132, %p133
      %p135 = scmp.ne.s32.totalorder %s121, %s122
      %p136 = scmp.eq.s32.totalorder %s22, 1
      %p137 = por %p135, %p136
      %p139 = scmp.ne.s32.totalorder %s122, %s138
      %p140 = scmp.eq.s32.totalorder %s22, 0
      %p141 = por %p139, %p140
      %p142 = scmp.le.s32.totalorder 1, %s16
      %p143 = scmp.lt.s32.totalorder %s16, 3
      %p144 = pnand %p142, %p143
      %p145 = pneg %p144
      // Predicated region
      $region9: #{tpu_custom_call.1} parent=5 // pred_check
        _
      $region10: #{tpu_custom_call.1} parent=5 // pred_check_branch
        %147 = sbr.rel (%p144) target = $region12
      $region11: #{tpu_custom_call.1} parent=5 // pred_region
        %s148 = ssub.s32 %s16, 1
        // Predicated region
        $region13: #{tpu_custom_call.1} parent=11 // pred_check
          %p149 = pneg %p54
        $region14: #{tpu_custom_call.1} parent=11 // pred_check_branch
          %151 = sbr.rel (%p149) target = $region16
        $region15: #{tpu_custom_call.1} parent=11 // pred_region
          %s152 = smul.u32 2, %s25
          %s154 = ssub.s32 256, 256
          %155 = vsyncadd [#allocation3], %s154
          %s156 = smul.addr %s152, 128
          %s157 = scalar_lea.hbm %s0, %s156
          %s158 = sshll.u32 [#allocation2], 4
          %s159 = int_to_ptr.vmem [resolvable:$true] %s158
          %164 = dma.hbm_to_vmem [thread:$0]  %s157, 256, %s159, [#allocation3], 128, 128, 8
        $region16: #{tpu_custom_call.1} parent=11 // pred_fallthru
          _
      $region12: #{tpu_custom_call.1} parent=5 // pred_fallthru
        _
      %p165 = scmp.lt.s32.totalorder %s16, 2
      // Predicated region
      $region17: #{tpu_custom_call.1} parent=5 // pred_check
        %p166 = pneg %p165
      $region18: #{tpu_custom_call.1} parent=5 // pred_check_branch
        %168 = sbr.rel (%p166) target = $region20
      $region19: #{tpu_custom_call.1} parent=5 // pred_region
        // Predicated region
        $region21: #{tpu_custom_call.1} parent=19 // pred_check
          %p169 = pneg %p74
        $region22: #{tpu_custom_call.1} parent=19 // pred_check_branch
          %171 = sbr.rel (%p169) target = $region24
        $region23: #{tpu_custom_call.1} parent=19 // pred_region
          %s172 = sand.u32 %s16, 1
          %s173 = scalar_lea.sflag [#allocation6], %s172
          %s174 = sand.u32 %s64, 1
          %s175 = smul.addr %s174, 128
          %s176 = scalar_lea.vmem [#allocation5], %s175
          %s177 = smul.u32 4, %s24
          %s179 = ssub.s32 2048, 2048
          %180 = vsyncadd %s173, %s179
          %s181 = smul.addr %s177, 128
          %s182 = scalar_lea.hbm %s1, %s181
          %s183 = sshll.u32 %s176, 4
          %s184 = int_to_ptr.vmem [resolvable:$true] %s183
          %189 = dma.hbm_to_vmem [thread:$0]  %s182, 2048, %s184, %s173, 1024, 512, 32
        $region24: #{tpu_custom_call.1} parent=19 // pred_fallthru
          _
        // Predicated region
        $region25: #{tpu_custom_call.1} parent=19 // pred_check
          %p190 = pneg %p100
        $region26: #{tpu_custom_call.1} parent=19 // pred_check_branch
          %192 = sbr.rel (%p190) target = $region28
        $region27: #{tpu_custom_call.1} parent=19 // pred_region
          %s193 = sand.u32 %s16, 1
          %s194 = scalar_lea.sflag [#allocation6], %s193
          %s195 = sand.u32 %s90, 1
          %s196 = smul.addr %s195, 4
          %s197 = scalar_lea.vmem [#allocation7], %s196
          %s198 = smul.u32 4, %s24
          %s200 = ssub.s32 64, 64
          %201 = vsyncadd %s194, %s200
          %s202 = smul.addr %s198, 16
          %s203 = scalar_lea.hbm %s2, %s202
          %s205 = sshll.u32 %s197, 4
          %s206 = int_to_ptr.vmem [resolvable:$true] %s205
          %208 = dma.hbm_to_vmem [thread:$0]  %s203, 64, %s206, %s194
        $region28: #{tpu_custom_call.1} parent=19 // pred_fallthru
          _
      $region20: #{tpu_custom_call.1} parent=5 // pred_fallthru
        _
      %p209 = scmp.le.s32.totalorder 1, %s16
      %p210 = scmp.lt.s32.totalorder %s16, 3
      %p211 = pnand %p209, %p210
      %p212 = pneg %p211
      // Predicated region
      $region29: #{tpu_custom_call.1} parent=5 // pred_check
        _
      $region30: #{tpu_custom_call.1} parent=5 // pred_check_branch
        %214 = sbr.rel (%p211) target = $region32
      $region31: #{tpu_custom_call.1} parent=5 // pred_region
        %s215 = ssub.s32 %s16, 1
        // Predicated region
        $region33: #{tpu_custom_call.1} parent=31 // pred_check
          %p216 = pneg %p54
        $region34: #{tpu_custom_call.1} parent=31 // pred_check_branch
          %218 = sbr.rel (%p216) target = $region36
        $region35: #{tpu_custom_call.1} parent=31 // pred_region
          %219 = dma.done [#allocation3], 256
        $region36: #{tpu_custom_call.1} parent=31 // pred_fallthru
          _
        %s220 = sand.u32 %s21, 1
        %s221 = scalar_lea.sflag [#allocation6], %s220
        %s222 = sand.u32 %s67, 1
        %s223 = smul.addr %s222, 128
        %s224 = scalar_lea.vmem [#allocation5], %s223
        // Predicated region
        $region37: #{tpu_custom_call.1} parent=31 // pred_check
          %p225 = pneg %p80
        $region38: #{tpu_custom_call.1} parent=31 // pred_check_branch
          %227 = sbr.rel (%p225) target = $region40
        $region39: #{tpu_custom_call.1} parent=31 // pred_region
          %228 = dma.done %s221, 2048
        $region40: #{tpu_custom_call.1} parent=31 // pred_fallthru
          _
        %s229 = sand.u32 %s21, 1
        %s230 = scalar_lea.sflag [#allocation6], %s229
        %s231 = sand.u32 %s93, 1
        %s232 = smul.addr %s231, 4
        %s233 = scalar_lea.vmem [#allocation7], %s232
        // Predicated region
        $region41: #{tpu_custom_call.1} parent=31 // pred_check
          %p234 = pneg %p106
        $region42: #{tpu_custom_call.1} parent=31 // pred_check_branch
          %236 = sbr.rel (%p234) target = $region44
        $region43: #{tpu_custom_call.1} parent=31 // pred_region
          %237 = dma.done %s230, 64
        $region44: #{tpu_custom_call.1} parent=31 // pred_fallthru
          _
        %p238 = pneg %p54
        %p239 = pneg %p51
        %s240 = sand.u32 %s21, 1
        %s241 = scalar_lea.sflag [#allocation6], %s240
        %s242 = sand.u32 %s67, 1
        %s243 = smul.addr %s242, 128
        %s244 = scalar_lea.vmem [#allocation5], %s243
        %p245 = pneg %p80
        %p246 = pneg %p77
        %s247 = sand.u32 %s21, 1
        %s248 = scalar_lea.sflag [#allocation6], %s247
        %s249 = sand.u32 %s93, 1
        %s250 = smul.addr %s249, 4
        %s251 = scalar_lea.vmem [#allocation7], %s250
        %p252 = pneg %p106
        %p253 = pneg %p103
        %p254 = pneg %p134
        %p255 = pneg %p131
        %s256 = sand.u32 %s121, 1
        %s257 = scalar_lea.sflag [#allocation4], %s256
        %s258 = sand.u32 %s121, 1
        %s259 = smul.addr %s258, 64
        %s260 = scalar_lea.vmem [#allocation8], %s259
        %s261 = smul.u32 2, %s25
        %s262 = smul.u32 4, %s26
        %s263 = smul.u32 4, %s26
        %s264 = smul.u32 2, %s25
        %s265 = smul.u32 4, %s26
        %v266 = vld [vmem:[#allocation2] sm:$0xff]
        %v267 = vld [vmem:[#allocation2 + $0x8] sm:$0xff]
        %v268 = vld [vmem:[%s224] sm:$0xff]
        %v269 = vld [vmem:[%s224 + $0x8] sm:$0xff]
        %v270 = vld [vmem:[%s224 + $0x10] sm:$0xff]
        %v271 = vld [vmem:[%s224 + $0x18] sm:$0xff]
        %v272 = vld [vmem:[%s224 + $0x20] sm:$0xff]
        %v273 = vld [vmem:[%s224 + $0x28] sm:$0xff]
        %v274 = vld [vmem:[%s224 + $0x30] sm:$0xff]
        %v275 = vld [vmem:[%s224 + $0x38] sm:$0xff]
        %v276 = vld [vmem:[%s224 + $0x40] sm:$0xff]
        %v277 = vld [vmem:[%s224 + $0x48] sm:$0xff]
        %v278 = vld [vmem:[%s224 + $0x50] sm:$0xff]
        %v279 = vld [vmem:[%s224 + $0x58] sm:$0xff]
        %v280 = vld [vmem:[%s224 + $0x60] sm:$0xff]
        %v281 = vld [vmem:[%s224 + $0x68] sm:$0xff]
        %v282 = vld [vmem:[%s224 + $0x70] sm:$0xff]
        %v283 = vld [vmem:[%s224 + $0x78] sm:$0xff]
        %v284 = vld [vmem:[%s233] sm:$0xf]
        %v286 = vlaneseq
        %v287 = vshrl.u32 %v286, 7
        %v288 = vsub.s32 0, %v287
        %v289 = vrot.slane %v284, %v288
        %v290 = vlaneseq
        %v291 = vshrl.u32 %v290, 7
        %v292 = vsub.s32 1, %v291
        %v293 = vrot.slane %v284, %v292
        %v294 = vlaneseq
        %v295 = vshrl.u32 %v294, 7
        %v296 = vsub.s32 2, %v295
        %v297 = vrot.slane %v284, %v296
        %v298 = vlaneseq
        %v299 = vshrl.u32 %v298, 7
        %v300 = vsub.s32 3, %v299
        %v301 = vrot.slane %v284, %v300
        %vm306 = vcmask 261120
        %v308 = vsel %vm306, %v266, 0
        %v311 = vsel %vm306, %v267, 0
        %313 = vmatprep.subr.mxu0 %v269
        %314 = vmatpush1.msra.mxu0 %v268
        %315 = vmatprep.subr.mxu0 %v273
        %316 = vmatpush1.msra.mxu0 %v272
        %317 = vmatprep.subr.mxu0 %v277
        %318 = vmatpush1.msra.mxu0 %v276
        %319 = vmatprep.subr.mxu0 %v281
        %320 = vmatpush1.msra.mxu0 %v280
        %321 = vmatprep.subr.mxu0 0.0
        %322 = vmatpush1.msra.mxu0 0.0
        %323 = vmatprep.subr.mxu0 0.0
        %324 = vmatpush1.msra.mxu0 0.0
        %325 = vmatprep.subr.mxu0 0.0
        %326 = vmatpush1.msra.mxu0 0.0
        %327 = vmatprep.subr.mxu0 0.0
        %328 = vmatpush1.msra.mxu0 0.0
        %329 = vmatprep.subr.mxu0 0.0
        %330 = vmatpush1.msra.mxu0 0.0
        %331 = vmatprep.subr.mxu0 0.0
        %332 = vmatpush1.msra.mxu0 0.0
        %333 = vmatprep.subr.mxu0 0.0
        %334 = vmatpush1.msra.mxu0 0.0
        %335 = vmatprep.subr.mxu0 0.0
        %336 = vmatpush1.msra.mxu0 0.0
        %337 = vmatprep.subr.mxu0 0.0
        %338 = vmatpush1.msra.mxu0 0.0
        %339 = vmatprep.subr.mxu0 0.0
        %340 = vmatpush1.msra.mxu0 0.0
        %341 = vmatprep.subr.mxu0 0.0
        %342 = vmatpush1.msra.mxu0 0.0
        %343 = vmatprep.subr.mxu0 0.0
        %344 = vmatpush1.msra.mxu0 0.0
        %345 = vmatprep.subr.mxu0 0.0
        %346 = vmatpush1.msra.mxu0 0.0
        %347 = vmatprep.subr.mxu0 0.0
        %348 = vmatpush1.msra.mxu0 0.0
        %349 = vmatprep.subr.mxu0 0.0
        %350 = vmatpush1.msra.mxu0 0.0
        %351 = vmatprep.subr.mxu0 0.0
        %352 = vmatpush1.msra.mxu0 0.0
        %353 = vmatprep.subr.mxu0 0.0
        %354 = vmatpush1.msra.mxu0 0.0
        %355 = vmatprep.subr.mxu0 0.0
        %356 = vmatpush1.msra.mxu0 0.0
        %357 = vmatprep.subr.mxu0 0.0
        %358 = vmatpush1.msra.mxu0 0.0
        %359 = vmatprep.subr.mxu0 0.0
        %360 = vmatpush1.msra.mxu0 0.0
        %361 = vmatprep.subr.mxu0 0.0
        %362 = vmatpush1.msra.mxu0 0.0
        %363 = vmatprep.subr.mxu0 0.0
        %364 = vmatpush1.msra.mxu0 0.0
        %365 = vmatprep.subr.mxu0 0.0
        %366 = vmatpush1.msra.mxu0 0.0
        %367 = vmatprep.subr.mxu0 0.0
        %368 = vmatpush1.msra.mxu0 0.0
        %369 = vmatprep.subr.mxu0 0.0
        %370 = vmatpush1.msra.mxu0 0.0
        %371 = vmatprep.subr.mxu0 0.0
        %372 = vmatpush1.msra.mxu0 0.0
        %373 = vmatprep.subr.mxu0 0.0
        %374 = vmatpush1.msra.mxu0 0.0
        %375 = vmatprep.subr.mxu0 0.0
        %376 = vmatpush1.msra.mxu0 0.0
        %377 = vmatprep.mubr.f32.mxu0 0.0
        %378 = vmatmul.mubr.f32.gmra.mrb[0].mxu0 %v308
        %v379 = vpop.f32.mrb[0].mxu0
        %v380 = vadd.f32 %v289, %v379
        %v381 = vpop.f32.mrb[0].mxu0
        %v382 = vadd.f32 %v293, %v381
        %383 = vmatprep.mubr.f32.mxu0 0.0
        %384 = vmatmul.mubr.f32.gmra.mrb[0].mxu0 %v311
        %v385 = vpop.f32.mrb[0].mxu0
        %v386 = vadd.f32 %v289, %v385
        %v387 = vpop.f32.mrb[0].mxu0
        %v388 = vadd.f32 %v293, %v387
        %389 = vdwg.mxu0
        %390 = vmatprep.subr.mxu0 %v271
        %391 = vmatpush1.msra.mxu0 %v270
        %392 = vmatprep.subr.mxu0 %v275
        %393 = vmatpush1.msra.mxu0 %v274
        %394 = vmatprep.subr.mxu0 %v279
        %395 = vmatpush1.msra.mxu0 %v278
        %396 = vmatprep.subr.mxu0 %v283
        %397 = vmatpush1.msra.mxu0 %v282
        %398 = vmatprep.subr.mxu0 0.0
        %399 = vmatpush1.msra.mxu0 0.0
        %400 = vmatprep.subr.mxu0 0.0
        %401 = vmatpush1.msra.mxu0 0.0
        %402 = vmatprep.subr.mxu0 0.0
        %403 = vmatpush1.msra.mxu0 0.0
        %404 = vmatprep.subr.mxu0 0.0
        %405 = vmatpush1.msra.mxu0 0.0
        %406 = vmatprep.subr.mxu0 0.0
        %407 = vmatpush1.msra.mxu0 0.0
        %408 = vmatprep.subr.mxu0 0.0
        %409 = vmatpush1.msra.mxu0 0.0
        %410 = vmatprep.subr.mxu0 0.0
        %411 = vmatpush1.msra.mxu0 0.0
        %412 = vmatprep.subr.mxu0 0.0
        %413 = vmatpush1.msra.mxu0 0.0
        %414 = vmatprep.subr.mxu0 0.0
        %415 = vmatpush1.msra.mxu0 0.0
        %416 = vmatprep.subr.mxu0 0.0
        %417 = vmatpush1.msra.mxu0 0.0
        %418 = vmatprep.subr.mxu0 0.0
        %419 = vmatpush1.msra.mxu0 0.0
        %420 = vmatprep.subr.mxu0 0.0
        %421 = vmatpush1.msra.mxu0 0.0
        %422 = vmatprep.subr.mxu0 0.0
        %423 = vmatpush1.msra.mxu0 0.0
        %424 = vmatprep.subr.mxu0 0.0
        %425 = vmatpush1.msra.mxu0 0.0
        %426 = vmatprep.subr.mxu0 0.0
        %427 = vmatpush1.msra.mxu0 0.0
        %428 = vmatprep.subr.mxu0 0.0
        %429 = vmatpush1.msra.mxu0 0.0
        %430 = vmatprep.subr.mxu0 0.0
        %431 = vmatpush1.msra.mxu0 0.0
        %432 = vmatprep.subr.mxu0 0.0
        %433 = vmatpush1.msra.mxu0 0.0
        %434 = vmatprep.subr.mxu0 0.0
        %435 = vmatpush1.msra.mxu0 0.0
        %436 = vmatprep.subr.mxu0 0.0
        %437 = vmatpush1.msra.mxu0 0.0
        %438 = vmatprep.subr.mxu0 0.0
        %439 = vmatpush1.msra.mxu0 0.0
        %440 = vmatprep.subr.mxu0 0.0
        %441 = vmatpush1.msra.mxu0 0.0
        %442 = vmatprep.subr.mxu0 0.0
        %443 = vmatpush1.msra.mxu0 0.0
        %444 = vmatprep.subr.mxu0 0.0
        %445 = vmatpush1.msra.mxu0 0.0
        %446 = vmatprep.subr.mxu0 0.0
        %447 = vmatpush1.msra.mxu0 0.0
        %448 = vmatprep.subr.mxu0 0.0
        %449 = vmatpush1.msra.mxu0 0.0
        %450 = vmatprep.subr.mxu0 0.0
        %451 = vmatpush1.msra.mxu0 0.0
        %452 = vmatprep.subr.mxu0 0.0
        %453 = vmatpush1.msra.mxu0 0.0
        %454 = vmatprep.mubr.f32.mxu0 0.0
        %455 = vmatmul.mubr.f32.gmra.mrb[0].mxu0 %v308
        %v456 = vpop.f32.mrb[0].mxu0
        %v457 = vadd.f32 %v297, %v456
        %v458 = vpop.f32.mrb[0].mxu0
        %v459 = vadd.f32 %v301, %v458
        %460 = vmatprep.mubr.f32.mxu0 0.0
        %461 = vmatmul.mubr.f32.gmra.mrb[0].mxu0 %v311
        %v462 = vpop.f32.mrb[0].mxu0
        %v463 = vadd.f32 %v297, %v462
        %v464 = vpop.f32.mrb[0].mxu0
        %v465 = vadd.f32 %v301, %v464
        %466 = vdwg.mxu0
        %467 = vst [vmem:[%s260] sm:$0xff] %v380
        %468 = vst [vmem:[%s260 + $0x8] sm:$0xff] %v382
        %469 = vst [vmem:[%s260 + $0x10] sm:$0xff] %v457
        %470 = vst [vmem:[%s260 + $0x18] sm:$0xff] %v459
        %471 = vst [vmem:[%s260 + $0x20] sm:$0xff] %v386
        %472 = vst [vmem:[%s260 + $0x28] sm:$0xff] %v388
        %473 = vst [vmem:[%s260 + $0x30] sm:$0xff] %v463
        %474 = vst [vmem:[%s260 + $0x38] sm:$0xff] %v465
        %s475 = sand.u32 %s121, 1
        %s476 = scalar_lea.sflag [#allocation4], %s475
        %s477 = sand.u32 %s121, 1
        %s478 = smul.addr %s477, 64
        %s479 = scalar_lea.vmem [#allocation8], %s478
        // Predicated region
        $region45: #{tpu_custom_call.1} parent=31 // pred_check
          %p480 = pneg %p131
        $region46: #{tpu_custom_call.1} parent=31 // pred_check_branch
          %482 = sbr.rel (%p480) target = $region48
        $region47: #{tpu_custom_call.1} parent=31 // pred_region
          %s483 = smul.u32 2, %s25
          %s484 = smul.u32 4, %s26
          %s486 = ssub.s32 1024, 1024
          %487 = vsyncadd %s476, %s486
          %s488 = smul.addr %s483, 8
          %s489 = sadd.s32 %s484, %s488
          %s490 = smul.addr %s489, 128
          %s491 = scalar_lea.hbm %s3, %s490
          %s492 = sshll.u32 %s479, 4
          %s493 = int_to_ptr.vmem [resolvable:$true] %s492
          %498 = dma.vmem_to_hbm [thread:$0]  %s493, 1024, %s491, %s476, 512, 1024, 32
        $region48: #{tpu_custom_call.1} parent=31 // pred_fallthru
          _
      $region32: #{tpu_custom_call.1} parent=5 // pred_fallthru
        _
      %p499 = scmp.le.s32.totalorder 2, %s16
      // Predicated region
      $region49: #{tpu_custom_call.1} parent=5 // pred_check
        %p500 = pneg %p499
      $region50: #{tpu_custom_call.1} parent=5 // pred_check_branch
        %502 = sbr.rel (%p500) target = $region52
      $region51: #{tpu_custom_call.1} parent=5 // pred_region
        %s503 = ssub.s32 %s16, 2
        // Predicated region
        $region53: #{tpu_custom_call.1} parent=51 // pred_check
          %p504 = pneg %p137
        $region54: #{tpu_custom_call.1} parent=51 // pred_check_branch
          %506 = sbr.rel (%p504) target = $region56
        $region55: #{tpu_custom_call.1} parent=51 // pred_region
          %s507 = sand.u32 %s122, 1
          %s508 = scalar_lea.sflag [#allocation4], %s507
          %s509 = sand.u32 %s122, 1
          %s510 = smul.addr %s509, 64
          %s511 = scalar_lea.vmem [#allocation8], %s510
          %512 = dma.done %s508, 1024
        $region56: #{tpu_custom_call.1} parent=51 // pred_fallthru
          _
      $region52: #{tpu_custom_call.1} parent=5 // pred_fallthru
        _
    $region6: #{tpu_custom_call.1} parent=1 // loop_footer
      %s20 = sadd.s32 1, %s16
    $region7: #{tpu_custom_call.1} parent=1 // loop_footer_branch
      %15 = sbr.rel target = $region3
    $region8: #{tpu_custom_call.1} parent=1 // loop_exit
      _
    %513 = vsyncpa [#allocation3], 1
    %s514 = scalar_lea.sflag [#allocation3], 1
    %515 = vsyncpa %s514, 1
    %516 = vsyncpa [#allocation6], 1
    %s517 = scalar_lea.sflag [#allocation6], 1
    %518 = vsyncpa %s517, 1
    %519 = vsyncpa [#allocation4], 1
    %s520 = scalar_lea.sflag [#allocation4], 1
    %521 = vsyncpa %s520, 1

</llo_original>
